<compile_context>
chip_gen: v7x
topology: tpu7x:2x2x1
jax: 0.10.0
libtpu: 0.0.40
codegen_flags: <defaults>
</compile_context>

<pallas_src>
import functools

import jax
import jax.numpy as jnp
from jax.experimental import pallas as pl
from jax.experimental.pallas import tpu as pltpu

_LANES = 128
_DEFAULT_BLOCK_ROWS = 1024  # (1024, 128) f32 tile = 512 KiB per input


def _round_up(a, b):
    return (a + b - 1) // b * b


def _dice_bce_kernel(x_ref, t_ref, o_ref,
                     inter_acc, pt_acc, bce_acc,
                     *, smooth, inv_n_valid):
    """Grid axis 0 streams (block_rows, 128) tiles of the flattened inputs.

    inter_acc / pt_acc / bce_acc are (block_rows, 128) f32 VMEM accumulators
    that persist across grid steps.  o_ref is a (1, 1) SMEM scalar that
    receives the final loss on the last step.
    """
    i = pl.program_id(0)

    @pl.when(i == 0)
    def _init():
        inter_acc[...] = jnp.zeros_like(inter_acc)
        pt_acc[...] = jnp.zeros_like(pt_acc)
        bce_acc[...] = jnp.zeros_like(bce_acc)

    x = x_ref[...].astype(jnp.float32)
    t = t_ref[...].astype(jnp.float32)

    # Numerically stable sigmoid and logits-form BCE share one exp/element.
    e = jnp.exp(-jnp.abs(x))                               # in (0, 1]
    denom = 1.0 + e
    p = jnp.where(x >= 0, 1.0, e) / denom                  # sigmoid(x)
    # TODO(synk): PyTorch's binary_cross_entropy clamps log terms at -100;
    # the logits form below is exact (and more stable) for all finite x and
    # only differs for |x| > 100, where BCE saturates anyway.
    bce = jnp.maximum(x, 0.0) - x * t + jnp.log(denom)     # BCE-with-logits

    # Hot path: pure VALU elementwise accumulation (no cross-lane reductions,
    # no scalar SMEM read-modify-write per tile).
    inter_acc[...] += p * t
    pt_acc[...] += p + t          # dice denominator only needs sum(p)+sum(t)
    bce_acc[...] += bce

    @pl.when(i == pl.num_programs(0) - 1)
    def _finalize():
        intersection = jnp.sum(inter_acc[...])
        sum_pt = jnp.sum(pt_acc[...])
        sum_bce = jnp.sum(bce_acc[...])
        dice_loss = 1.0 - (2.0 * intersection + smooth) / (sum_pt + smooth)
        o_ref[0, 0] = sum_bce * inv_n_valid + dice_loss


def dice_bce_loss(inputs, targets, smooth=1.0, block_rows=_DEFAULT_BLOCK_ROWS):
    """Pallas implementation of DiceBCELoss.forward. Returns a scalar f32."""
    x = inputs.reshape(-1)
    t = targets.reshape(-1)
    n = x.shape[0]

    rows = pl.cdiv(n, _LANES)
    # Clamp the tile to the input size (keeps small inputs a single tile)
    # while respecting the (8, 128) sublane constraint.
    block_rows = min(block_rows, _round_up(rows, 8))
    padded_rows = _round_up(rows, block_rows)
    n_pad = padded_rows * _LANES
    if n_pad != n:
        # Padded logits of -1e30 / targets of 0 contribute exactly zero to
        # all partial sums, so the kernel needs no masking per tile.
        x = jnp.pad(x, (0, n_pad - n), constant_values=-1e30)
        t = jnp.pad(t, (0, n_pad - n))
    x2 = x.reshape(padded_rows, _LANES)
    t2 = t.reshape(padded_rows, _LANES)
    n_tiles = padded_rows // block_rows

    kernel = functools.partial(
        _dice_bce_kernel, smooth=float(smooth), inv_n_valid=1.0 / float(n)
    )

    out = pl.pallas_call(
        kernel,
        out_shape=jax.ShapeDtypeStruct((1, 1), jnp.float32),
        grid_spec=pltpu.PrefetchScalarGridSpec(
            num_scalar_prefetch=0,
            grid=(n_tiles,),
            in_specs=[
                pl.BlockSpec((block_rows, _LANES), lambda i: (i, 0)),
                pl.BlockSpec((block_rows, _LANES), lambda i: (i, 0)),
            ],
            out_specs=pl.BlockSpec(
                (1, 1), lambda i: (0, 0), memory_space=pltpu.MemorySpace.SMEM
            ),
            scratch_shapes=[
                pltpu.VMEM((block_rows, _LANES), jnp.float32),  # sum(p*t)
                pltpu.VMEM((block_rows, _LANES), jnp.float32),  # sum(p)+sum(t)
                pltpu.VMEM((block_rows, _LANES), jnp.float32),  # sum(bce)
            ],
        ),
        compiler_params=pltpu.CompilerParams(
            # Sequential accumulation into shared VMEM scratch; must stay
            # "arbitrary".  A v7x two-TensorCore split would need per-core
            # accumulators + an explicit combine (left as a future tweak).
            dimension_semantics=("arbitrary",),
        ),
    )(x2, t2)
    return out[0, 0]


def _reference_dice_bce(inputs, targets, smooth=1.0):
    # Matches PyTorch semantics: sigmoid -> binary_cross_entropy (log clamp
    # at -100) + dice loss.
    p = jax.nn.sigmoid(inputs).reshape(-1)
    t = targets.reshape(-1)
    intersection = jnp.sum(p * t)
    dice_loss = 1.0 - (2.0 * intersection + smooth) / (jnp.sum(p) + jnp.sum(t) + smooth)
    log_p = jnp.maximum(jnp.log(p), -100.0)
    log_1mp = jnp.maximum(jnp.log(1.0 - p), -100.0)
    bce = jnp.mean(-(t * log_p + (1.0 - t) * log_1mp))
    return bce + dice_loss


if __name__ == "__main__":
    key = jax.random.PRNGKey(0)
    k1, k2 = jax.random.split(key)
    # NCHW inputs, same as the PyTorch module would see.
    x = jax.random.normal(k1, (2, 4, 16, 16), dtype=jnp.float32)  # logits
    tgt = (jax.random.uniform(k2, (2, 4, 16, 16)) > 0.5).astype(jnp.float32)

    loss = dice_bce_loss(x, tgt, smooth=1.0)
    jax.block_until_ready(loss)

    ref = _reference_dice_bce(x, tgt, smooth=1.0)
    assert jnp.allclose(loss, ref, rtol=1e-5, atol=1e-5), (loss, ref)
    print("KERNEL_OK")
</pallas_src>

<mosaic_0001>
module attributes {stable_mosaic.version = 11 : i64} {
  func.func @_dice_bce_kernel(%arg0: i32, %arg1: memref<16x128xf32, #tpu.memory_space<vmem>>, %arg2: memref<16x128xf32, #tpu.memory_space<vmem>>, %arg3: memref<1x1xf32, #tpu.memory_space<smem>>, %arg4: memref<16x128xf32, #tpu.memory_space<vmem>>, %arg5: memref<16x128xf32, #tpu.memory_space<vmem>>, %arg6: memref<16x128xf32, #tpu.memory_space<vmem>>) attributes {dimension_semantics = [#tpu.dimension_semantics<arbitrary>], iteration_bounds = array<i64: 1>, scalar_prefetch = 0 : i64, scratch_operands = 3 : i64, tpu.core_type = #tpu.core_type<tc>, window_params = [{transform_indices = @transform_0, window_bounds = array<i64: 16, 128>}, {transform_indices = @transform_1, window_bounds = array<i64: 16, 128>}, {transform_indices = @transform_2, window_bounds = array<i64: 1, 1>}]} {
    %c0_i32 = arith.constant 0 : i32
    %0 = arith.cmpi eq, %arg0, %c0_i32 : i32
    %1 = arith.extui %0 : i1 to i32
    %c0_i32_0 = arith.constant 0 : i32
    %2 = arith.cmpi ne, %1, %c0_i32_0 : i32
    scf.if %2 {
      %cst_22 = arith.constant 0.000000e+00 : f32
      %36 = vector.broadcast %cst_22 : f32 to vector<16x128xf32>
      %c0_23 = arith.constant 0 : index
      %c0_24 = arith.constant 0 : index
      %37 = vector.load %arg4[%c0_23, %c0_24] : memref<16x128xf32, #tpu.memory_space<vmem>>, vector<16x128xf32>
      tpu.vector_store %arg4[%c0_23, %c0_24], %36 {strides = array<i32>} : memref<16x128xf32, #tpu.memory_space<vmem>>, vector<16x128xf32>,
      %cst_25 = arith.constant 0.000000e+00 : f32
      %38 = vector.broadcast %cst_25 : f32 to vector<16x128xf32>
      %c0_26 = arith.constant 0 : index
      %c0_27 = arith.constant 0 : index
      %39 = vector.load %arg5[%c0_26, %c0_27] : memref<16x128xf32, #tpu.memory_space<vmem>>, vector<16x128xf32>
      tpu.vector_store %arg5[%c0_26, %c0_27], %38 {strides = array<i32>} : memref<16x128xf32, #tpu.memory_space<vmem>>, vector<16x128xf32>,
      %cst_28 = arith.constant 0.000000e+00 : f32
      %40 = vector.broadcast %cst_28 : f32 to vector<16x128xf32>
      %c0_29 = arith.constant 0 : index
      %c0_30 = arith.constant 0 : index
      %41 = vector.load %arg6[%c0_29, %c0_30] : memref<16x128xf32, #tpu.memory_space<vmem>>, vector<16x128xf32>
      tpu.vector_store %arg6[%c0_29, %c0_30], %40 {strides = array<i32>} : memref<16x128xf32, #tpu.memory_space<vmem>>, vector<16x128xf32>,
    } else {
    }
    %c0 = arith.constant 0 : index
    %c0_1 = arith.constant 0 : index
    %3 = vector.load %arg1[%c0, %c0_1] : memref<16x128xf32, #tpu.memory_space<vmem>>, vector<16x128xf32>
    %c0_2 = arith.constant 0 : index
    %c0_3 = arith.constant 0 : index
    %4 = vector.load %arg2[%c0_2, %c0_3] : memref<16x128xf32, #tpu.memory_space<vmem>>, vector<16x128xf32>
    %5 = math.absf %3 : vector<16x128xf32>
    %cst = arith.constant 0.000000e+00 : f32
    %6 = vector.broadcast %cst : f32 to vector<16x128xf32>
    %7 = arith.subf %6, %5 : vector<16x128xf32>
    %8 = math.exp %7 : vector<16x128xf32>
    %cst_4 = arith.constant 1.000000e+00 : f32
    %9 = vector.broadcast %cst_4 : f32 to vector<16x128xf32>
    %10 = arith.addf %9, %8 : vector<16x128xf32>
    %cst_5 = arith.constant 0.000000e+00 : f32
    %11 = vector.broadcast %cst_5 : f32 to vector<16x128xf32>
    %12 = arith.cmpf oge, %3, %11 : vector<16x128xf32>
    %cst_6 = arith.constant 1.000000e+00 : f32
    %13 = vector.broadcast %cst_6 : f32 to vector<16x128xf32>
    %14 = arith.select %12, %13, %8 : vector<16x128xi1>, vector<16x128xf32>
    %15 = arith.divf %14, %10 : vector<16x128xf32>
    %cst_7 = arith.constant 0.000000e+00 : f32
    %16 = vector.broadcast %cst_7 : f32 to vector<16x128xf32>
    %17 = arith.maximumf %3, %16 : vector<16x128xf32>
    %18 = arith.mulf %3, %4 : vector<16x128xf32>
    %19 = arith.subf %17, %18 : vector<16x128xf32>
    %20 = math.log %10 : vector<16x128xf32>
    %21 = arith.addf %19, %20 : vector<16x128xf32>
    %c0_8 = arith.constant 0 : index
    %c0_9 = arith.constant 0 : index
    %22 = vector.load %arg4[%c0_8, %c0_9] : memref<16x128xf32, #tpu.memory_space<vmem>>, vector<16x128xf32>
    %23 = arith.mulf %15, %4 : vector<16x128xf32>
    %24 = arith.addf %22, %23 : vector<16x128xf32>
    %c0_10 = arith.constant 0 : index
    %c0_11 = arith.constant 0 : index
    %25 = vector.load %arg4[%c0_10, %c0_11] : memref<16x128xf32, #tpu.memory_space<vmem>>, vector<16x128xf32>
    tpu.vector_store %arg4[%c0_10, %c0_11], %24 {strides = array<i32>} : memref<16x128xf32, #tpu.memory_space<vmem>>, vector<16x128xf32>,
    %c0_12 = arith.constant 0 : index
    %c0_13 = arith.constant 0 : index
    %26 = vector.load %arg5[%c0_12, %c0_13] : memref<16x128xf32, #tpu.memory_space<vmem>>, vector<16x128xf32>
    %27 = arith.addf %15, %4 : vector<16x128xf32>
    %28 = arith.addf %26, %27 : vector<16x128xf32>
    %c0_14 = arith.constant 0 : index
    %c0_15 = arith.constant 0 : index
    %29 = vector.load %arg5[%c0_14, %c0_15] : memref<16x128xf32, #tpu.memory_space<vmem>>, vector<16x128xf32>
    tpu.vector_store %arg5[%c0_14, %c0_15], %28 {strides = array<i32>} : memref<16x128xf32, #tpu.memory_space<vmem>>, vector<16x128xf32>,
    %c0_16 = arith.constant 0 : index
    %c0_17 = arith.constant 0 : index
    %30 = vector.load %arg6[%c0_16, %c0_17] : memref<16x128xf32, #tpu.memory_space<vmem>>, vector<16x128xf32>
    %31 = arith.addf %30, %21 : vector<16x128xf32>
    %c0_18 = arith.constant 0 : index
    %c0_19 = arith.constant 0 : index
    %32 = vector.load %arg6[%c0_18, %c0_19] : memref<16x128xf32, #tpu.memory_space<vmem>>, vector<16x128xf32>
    tpu.vector_store %arg6[%c0_18, %c0_19], %31 {strides = array<i32>} : memref<16x128xf32, #tpu.memory_space<vmem>>, vector<16x128xf32>,
    %c0_i32_20 = arith.constant 0 : i32
    %33 = arith.cmpi eq, %arg0, %c0_i32_20 : i32
    %34 = arith.extui %33 : i1 to i32
    %c0_i32_21 = arith.constant 0 : i32
    %35 = arith.cmpi ne, %34, %c0_i32_21 : i32
    scf.if %35 {
      %c0_22 = arith.constant 0 : index
      %c0_23 = arith.constant 0 : index
      %36 = vector.load %arg4[%c0_22, %c0_23] : memref<16x128xf32, #tpu.memory_space<vmem>>, vector<16x128xf32>
      %37 = vector.shape_cast %36 : vector<16x128xf32> to vector<1x16x128xf32>
      %cst_24 = arith.constant dense<0.000000e+00> : vector<1xf32>
      %38 = vector.multi_reduction <add>, %37, %cst_24 [1, 2] : vector<1x16x128xf32> to vector<1xf32>
      %39 = vector.shape_cast %38 : vector<1xf32> to vector<1x1x1xf32>
      %40 = vector.extract %39[0, 0, 0] : f32 from vector<1x1x1xf32>
      %c0_25 = arith.constant 0 : index
      %c0_26 = arith.constant 0 : index
      %41 = vector.load %arg5[%c0_25, %c0_26] : memref<16x128xf32, #tpu.memory_space<vmem>>, vector<16x128xf32>
      %42 = vector.shape_cast %41 : vector<16x128xf32> to vector<1x16x128xf32>
      %cst_27 = arith.constant dense<0.000000e+00> : vector<1xf32>
      %43 = vector.multi_reduction <add>, %42, %cst_27 [1, 2] : vector<1x16x128xf32> to vector<1xf32>
      %44 = vector.shape_cast %43 : vector<1xf32> to vector<1x1x1xf32>
      %45 = vector.extract %44[0, 0, 0] : f32 from vector<1x1x1xf32>
      %c0_28 = arith.constant 0 : index
      %c0_29 = arith.constant 0 : index
      %46 = vector.load %arg6[%c0_28, %c0_29] : memref<16x128xf32, #tpu.memory_space<vmem>>, vector<16x128xf32>
      %47 = vector.shape_cast %46 : vector<16x128xf32> to vector<1x16x128xf32>
      %cst_30 = arith.constant dense<0.000000e+00> : vector<1xf32>
      %48 = vector.multi_reduction <add>, %47, %cst_30 [1, 2] : vector<1x16x128xf32> to vector<1xf32>
      %49 = vector.shape_cast %48 : vector<1xf32> to vector<1x1x1xf32>
      %50 = vector.extract %49[0, 0, 0] : f32 from vector<1x1x1xf32>
      %cst_31 = arith.constant 2.000000e+00 : f32
      %51 = arith.mulf %cst_31, %40 : f32
      %cst_32 = arith.constant 1.000000e+00 : f32
      %52 = arith.addf %51, %cst_32 : f32
      %cst_33 = arith.constant 1.000000e+00 : f32
      %53 = arith.addf %45, %cst_33 : f32
      %54 = arith.divf %52, %53 : f32
      %cst_34 = arith.constant 1.000000e+00 : f32
      %55 = arith.subf %cst_34, %54 : f32
      %cst_35 = arith.constant 4.8828125E-4 : f32
      %56 = arith.mulf %50, %cst_35 : f32
      %57 = arith.addf %56, %55 : f32
      %c0_36 = arith.constant 0 : index
      %c0_37 = arith.constant 0 : index
      %58 = memref.load %arg3[%c0_36, %c0_37] : memref<1x1xf32, #tpu.memory_space<smem>>
      memref.store %57, %arg3[%c0_36, %c0_37] : memref<1x1xf32, #tpu.memory_space<smem>>
    } else {
    }
    return
  }
  func.func @transform_0(%arg0: i32) -> (i32, i32) {
    %c0_i32 = arith.constant 0 : i32
    %c0_i32_0 = arith.constant 0 : i32
    return %arg0, %c0_i32 : i32, i32
  }
  func.func @transform_1(%arg0: i32) -> (i32, i32) {
    %c0_i32 = arith.constant 0 : i32
    %c0_i32_0 = arith.constant 0 : i32
    return %arg0, %c0_i32 : i32, i32
  }
  func.func @transform_2(%arg0: i32) -> (i32, i32) {
    %c0_i32 = arith.constant 0 : i32
    %c0_i32_0 = arith.constant 0 : i32
    %c0_i32_1 = arith.constant 0 : i32
    return %c0_i32, %c0_i32_0 : i32, i32
  }
}

</mosaic_0001>

<llo_original>
// kernel: tpu_custom_call.1
$region0: #{tpu_custom_call.1}
  #allocation0 [shape = 'u32[]', space=smem, size = 0x4, offset = 0x4, fixed_abs, tag = 'smem constant byte address 0x4 - core index']
  #allocation1 [shape = 'u32[144,128]{1,0:T(1,128)}', space=vmem, size = 0x12000, scoped, tag = 'internal scratch']
  #allocation2 [shape = 'f32[16,128]{1,0:T(8,128)}', space=vmem, size = 0x2000, scoped, tag = 'scratch operand']
  #allocation3 [shape = 'f32[16,128]{1,0:T(8,128)}', space=vmem, size = 0x2000, scoped, tag = 'scratch operand']
  #allocation4 [shape = 'f32[16,128]{1,0:T(8,128)}', space=vmem, size = 0x2000, scoped, tag = 'scratch operand']
  %s0 = inlined_call_operand.hbm [shape: f32[16,128], index: 0, kind: input, shape index: {}]
  %s1 = inlined_call_operand.hbm [shape: f32[16,128], index: 1, kind: input, shape index: {}]
  %s2 = inlined_call_operand.hbm [shape: f32[1,1], index: 2, kind: output, shape index: {}]
  %s3 = sld [smem:[#allocation0]]
  $region34: #{tpu_custom_call.1} parent=0
    _
  %s5 = ssub.s32 1, %s3
  %s6 = scalar_select 0, %s5, %s3
  $region1: #{tpu_custom_call.1} parent=0
    #allocation5 [shape = 'u8[8192]{0}', space=vmem, size = 0x2000, scoped, tag = 'input window, operand 0, single buffered']
    #allocation6 [shape = 's32[1]{0}', space=sflag, size = 0x4, scoped, tag = 'scoped memory for tpu_custom_call.1']
    #allocation7 [shape = 's32[1]{0}', space=sflag, size = 0x4, scoped, tag = 'scoped memory for tpu_custom_call.1']
    #allocation8 [shape = 'u8[8192]{0}', space=vmem, size = 0x2000, scoped, tag = 'input window, operand 1, single buffered']
    #allocation9 [shape = 's32[1]{0}', space=sflag, size = 0x4, scoped, tag = 'scoped memory for tpu_custom_call.1']
    #allocation10 [shape = 'u8[512]{0}', space=smem, size = 0x200, scoped, tag = 'output window, operand 0, single buffered']
    %7 = vsyncpa [#allocation6], 0
    %8 = vsyncpa [#allocation9], 0
    %9 = vsyncpa [#allocation7], 0
    // Predicated region
    $region2: #{tpu_custom_call.1} parent=1 // pred_check
      _
    $region3: #{tpu_custom_call.1} parent=1 // pred_check_branch
      %11 = sbr.rel (0) target = $region5
    $region4: #{tpu_custom_call.1} parent=1 // pred_region
      %s13 = ssub.s32 256, 256
      %14 = vsyncadd [#allocation6], %s13
      %s15 = sshll.u32 [#allocation5], 4
      %s16 = int_to_ptr.vmem [resolvable:$true] %s15
      %21 = dma.hbm_to_vmem [thread:$0]  %s0, 256, %s16, [#allocation6], 128, 128, 8
    $region5: #{tpu_custom_call.1} parent=1 // pred_fallthru
      _
    // Predicated region
    $region6: #{tpu_custom_call.1} parent=1 // pred_check
      _
    $region7: #{tpu_custom_call.1} parent=1 // pred_check_branch
      %23 = sbr.rel (0) target = $region9
    $region8: #{tpu_custom_call.1} parent=1 // pred_region
      %s25 = ssub.s32 256, 256
      %26 = vsyncadd [#allocation9], %s25
      %s27 = sshll.u32 [#allocation8], 4
      %s28 = int_to_ptr.vmem [resolvable:$true] %s27
      %33 = dma.hbm_to_vmem [thread:$0]  %s1, 256, %s28, [#allocation9], 128, 128, 8
    $region9: #{tpu_custom_call.1} parent=1 // pred_fallthru
      _
    // Predicated region
    $region10: #{tpu_custom_call.1} parent=1 // pred_check
      _
    $region11: #{tpu_custom_call.1} parent=1 // pred_check_branch
      %35 = sbr.rel (0) target = $region13
    $region12: #{tpu_custom_call.1} parent=1 // pred_region
      %36 = dma.done [#allocation6], 256
    $region13: #{tpu_custom_call.1} parent=1 // pred_fallthru
      _
    // Predicated region
    $region14: #{tpu_custom_call.1} parent=1 // pred_check
      _
    $region15: #{tpu_custom_call.1} parent=1 // pred_check_branch
      %38 = sbr.rel (0) target = $region17
    $region16: #{tpu_custom_call.1} parent=1 // pred_region
      %39 = dma.done [#allocation9], 256
    $region17: #{tpu_custom_call.1} parent=1 // pred_fallthru
      _
    %p40 = scmp.eq.s32.totalorder 0, 0
    // Predicated region
    $region18: #{tpu_custom_call.1} parent=1 // pred_check
      %p41 = pneg %p40
    $region19: #{tpu_custom_call.1} parent=1 // pred_check_branch
      %43 = sbr.rel (%p41) target = $region21
    $region20: #{tpu_custom_call.1} parent=1 // pred_region
      %44 = vst [vmem:[#allocation2] sm:$0xff] 0.0
      %45 = vst [vmem:[#allocation2 + $0x8] sm:$0xff] 0.0
      %46 = vst [vmem:[#allocation3] sm:$0xff] 0.0
      %47 = vst [vmem:[#allocation3 + $0x8] sm:$0xff] 0.0
      %48 = vst [vmem:[#allocation4] sm:$0xff] 0.0
      %49 = vst [vmem:[#allocation4 + $0x8] sm:$0xff] 0.0
    $region21: #{tpu_custom_call.1} parent=1 // pred_fallthru
      _
    %v50 = vld [vmem:[#allocation5] sm:$0xff]
    %v51 = vld [vmem:[#allocation5 + $0x8] sm:$0xff]
    %v52 = vld [vmem:[#allocation8] sm:$0xff]
    %v53 = vld [vmem:[#allocation8 + $0x8] sm:$0xff]
    %v54 = vand.u32 2147483647, %v50
    %v55 = vand.u32 2147483647, %v51
    %v56 = vsub.f32 0.0, %v54
    %v57 = vsub.f32 0.0, %v55
    %v58 = vmul.f32 %v56, 1.442695
    %v59 = vpow.pop %v58
    %v60 = vmul.f32 %v57, 1.442695
    %v61 = vpow.pop %v60
    %v62 = vadd.f32 %v59, 1.0
    %v63 = vadd.f32 %v61, 1.0
    %vm64 = vcmp.ge.f32.partialorder %v50, 0.0
    %vm65 = vcmp.ge.f32.partialorder %v51, 0.0
    %v66 = vsel %vm64, 1.0, %v59
    %v67 = vsel %vm65, 1.0, %v61
    %v68 = vrcp.pop %v62
    %v69 = vmul.f32 %v66, %v68
    %v70 = vrcp.pop %v63
    %v71 = vmul.f32 %v67, %v70
    %v72 = vmax.f32 %v50, 0.0
    %v73 = vmax.f32 %v51, 0.0
    %v74 = vmul.f32 %v50, %v52
    %v75 = vmul.f32 %v51, %v53
    %v76 = vsub.f32 %v72, %v74
    %v77 = vsub.f32 %v73, %v75
    %v78 = vlog2.pop %v62
    %v79 = vmul.f32 %v78, 0.6931472
    %v80 = vlog2.pop %v63
    %v81 = vmul.f32 %v80, 0.6931472
    %v82 = vadd.f32 %v76, %v79
    %v83 = vadd.f32 %v77, %v81
    %v84 = vld [vmem:[#allocation2] sm:$0xff]
    %v85 = vld [vmem:[#allocation2 + $0x8] sm:$0xff]
    %v86 = vmul.f32 %v69, %v52
    %v87 = vmul.f32 %v71, %v53
    %v88 = vadd.f32 %v84, %v86
    %v89 = vadd.f32 %v85, %v87
    %90 = vst [vmem:[#allocation2] sm:$0xff] %v88
    %91 = vst [vmem:[#allocation2 + $0x8] sm:$0xff] %v89
    %v92 = vld [vmem:[#allocation3] sm:$0xff]
    %v93 = vld [vmem:[#allocation3 + $0x8] sm:$0xff]
    %v94 = vadd.f32 %v69, %v52
    %v95 = vadd.f32 %v71, %v53
    %v96 = vadd.f32 %v92, %v94
    %v97 = vadd.f32 %v93, %v95
    %98 = vst [vmem:[#allocation3] sm:$0xff] %v96
    %99 = vst [vmem:[#allocation3 + $0x8] sm:$0xff] %v97
    %v100 = vld [vmem:[#allocation4] sm:$0xff]
    %v101 = vld [vmem:[#allocation4 + $0x8] sm:$0xff]
    %v102 = vadd.f32 %v100, %v82
    %v103 = vadd.f32 %v101, %v83
    %104 = vst [vmem:[#allocation4] sm:$0xff] %v102
    %105 = vst [vmem:[#allocation4 + $0x8] sm:$0xff] %v103
    // Predicated region
    $region22: #{tpu_custom_call.1} parent=1 // pred_check
      %p106 = pneg %p40
    $region23: #{tpu_custom_call.1} parent=1 // pred_check_branch
      %108 = sbr.rel (%p106) target = $region25
    $region24: #{tpu_custom_call.1} parent=1 // pred_region
      %v109 = vld [vmem:[#allocation2] sm:$0xff]
      %v110 = vld [vmem:[#allocation2 + $0x8] sm:$0xff]
      %v111 = vadd.f32 %v109, %v110
      %112 = vadd.xlane.f32.xlu0 %v111
      %v113 = vpop.xlane.xlu0 %112
      %v114 = vrot.slane %v113, 4
      %v115 = vadd.f32 %v113, %v114
      %v116 = vrot.slane %v115, 2
      %v117 = vadd.f32 %v115, %v116
      %v118 = vrot.slane %v117, 1
      %v119 = vadd.f32 %v117, %v118
      %s120 = vtos %v119
      %v121 = vld [vmem:[#allocation3] sm:$0xff]
      %v122 = vld [vmem:[#allocation3 + $0x8] sm:$0xff]
      %v123 = vadd.f32 %v121, %v122
      %124 = vadd.xlane.f32.xlu0 %v123
      %v125 = vpop.xlane.xlu0 %124
      %v126 = vrot.slane %v125, 4
      %v127 = vadd.f32 %v125, %v126
      %v128 = vrot.slane %v127, 2
      %v129 = vadd.f32 %v127, %v128
      %v130 = vrot.slane %v129, 1
      %v131 = vadd.f32 %v129, %v130
      %s132 = vtos %v131
      %v133 = vld [vmem:[#allocation4] sm:$0xff]
      %v134 = vld [vmem:[#allocation4 + $0x8] sm:$0xff]
      %v135 = vadd.f32 %v133, %v134
      %136 = vadd.xlane.f32.xlu0 %v135
      %v137 = vpop.xlane.xlu0 %136
      %v138 = vrot.slane %v137, 4
      %v139 = vadd.f32 %v137, %v138
      %v140 = vrot.slane %v139, 2
      %v141 = vadd.f32 %v139, %v140
      %v142 = vrot.slane %v141, 1
      %v143 = vadd.f32 %v141, %v142
      %s144 = vtos %v143
      %s145 = smul.f32 %s120, 2.0
      %s146 = sadd.f32 %s145, 1.0
      %s147 = sadd.f32 %s132, 1.0
      %v148 = vstv %s147
      %v149 = vrcp.pop %v148
      %s150 = vtos %v149
      %s151 = smul.f32 %s146, %s150
      %s152 = ssub.f32 1.0, %s151
      %s153 = smul.f32 %s144, 0.00048828125
      %s154 = sadd.f32 %s153, %s152
      %s155 = scalar_lea.smem [#allocation10], 0
      %156 = sst [smem:[%s155]] %s154
    $region25: #{tpu_custom_call.1} parent=1 // pred_fallthru
      _
    // Predicated region
    $region26: #{tpu_custom_call.1} parent=1 // pred_check
      _
    $region27: #{tpu_custom_call.1} parent=1 // pred_check_branch
      %158 = sbr.rel (0) target = $region29
    $region28: #{tpu_custom_call.1} parent=1 // pred_region
      %s160 = ssub.s32 16, 16
      %161 = vsyncadd [#allocation7], %s160
      %164 = dma.smem_to_hbm [#allocation10], 16, %s2, [#allocation7]
    $region29: #{tpu_custom_call.1} parent=1 // pred_fallthru
      _
    // Predicated region
    $region30: #{tpu_custom_call.1} parent=1 // pred_check
      _
    $region31: #{tpu_custom_call.1} parent=1 // pred_check_branch
      %166 = sbr.rel (0) target = $region33
    $region32: #{tpu_custom_call.1} parent=1 // pred_region
      %167 = dma.done [#allocation7], 16
    $region33: #{tpu_custom_call.1} parent=1 // pred_fallthru
      _
    %168 = sfence
    %169 = vsyncpa [#allocation6], 1
    %170 = vsyncpa [#allocation9], 1
    %171 = vsyncpa [#allocation7], 1

</llo_original>
